<compile_context>
chip_gen: v7x
topology: tpu7x:2x2x1
jax: 0.10.0
libtpu: 0.0.40
codegen_flags: <defaults>
</compile_context>

<pallas_src>
import functools

import jax
import jax.numpy as jnp
from jax.experimental import pallas as pl
from jax.experimental.pallas import tpu as pltpu

HIDDEN = 128
MAX_BM = 2048      # max batch-tile rows per grid step
MIN_SPLIT_B = 512  # above this, force >=2 grid steps so v7x's 2 TCs both work


def _supports_bf16_elementwise():
    """bf16 VPU elementwise is profitable on v6e/v7x; keep f32 on v5e/older."""
    try:
        kind = jax.devices()[0].device_kind.lower()
    except Exception:
        return False
    if "tpu" not in kind:
        return False
    for old in ("v2", "v3", "v4", "v5"):
        if old in kind:
            return False
    return True


_BF16_EW = _supports_bf16_elementwise()


def actor_critic_kernel(
    s_ref,    # [bm, S]          state (bf16)
    w1_ref,   # [S, 128]         bf16
    b1_ref,   # [1, 128]         f32
    w2_ref,   # [128, 128]       bf16
    b2_ref,   # [1, 128]         f32
    wh_ref,   # [128, HEAD_PAD]  fused (actor|critic|zero-pad) head, bf16
    bh_ref,   # [1, HEAD_PAD]    f32
    out_ref,  # out: [bm, HEAD_PAD] bf16 slab; [:, :A] = actor pre-tanh, [:, A] = critic
    *,
    bf16_elementwise,
):
    x = s_ref[...]  # bf16

    if bf16_elementwise:
        # v6e/v7x: bias-add + relu in bf16, feed next dot directly (no re-cast).
        b1 = b1_ref[...].astype(jnp.bfloat16)
        b2 = b2_ref[...].astype(jnp.bfloat16)
        h1 = jnp.dot(x, w1_ref[...], preferred_element_type=jnp.float32)
        h1 = jnp.maximum(h1.astype(jnp.bfloat16) + b1, 0.0)
        h2 = jnp.dot(h1, w2_ref[...], preferred_element_type=jnp.float32)
        h2 = jnp.maximum(h2.astype(jnp.bfloat16) + b2, 0.0)
    else:
        # v5e: no bf16 VPU — keep elementwise in f32, cast once before each dot.
        b1 = b1_ref[...]
        b2 = b2_ref[...]
        h1 = jnp.dot(x, w1_ref[...], preferred_element_type=jnp.float32) + b1
        h1 = jnp.maximum(h1, 0.0)
        h2 = jnp.dot(h1.astype(jnp.bfloat16), w2_ref[...],
                     preferred_element_type=jnp.float32) + b2
        h2 = jnp.maximum(h2, 0.0).astype(jnp.bfloat16)

    # Fused actor+critic head: one lane-dense matmul; raw result stored in bf16.
    # tanh / slicing happen in the wrapper.
    y = jnp.dot(h2, wh_ref[...], preferred_element_type=jnp.float32) + bh_ref[...]
    out_ref[...] = y.astype(jnp.bfloat16)


def prepare_params(params, action_dim):
    """Fuse actor/critic heads into one lane-dense weight and cast weights to bf16."""
    w1, b1, w2, b2, wa, ba, wc, bc = params
    head_pad = max(128, ((action_dim + 1 + 127) // 128) * 128)

    wh = jnp.zeros((HIDDEN, head_pad), jnp.float32)
    wh = wh.at[:, :action_dim].set(wa)
    wh = wh.at[:, action_dim:action_dim + 1].set(wc)

    bh = jnp.zeros((1, head_pad), jnp.float32)
    bh = bh.at[:, :action_dim].set(ba[0])
    bh = bh.at[:, action_dim].set(bc[0, 0])

    return (
        w1.astype(jnp.bfloat16), b1,
        w2.astype(jnp.bfloat16), b2,
        wh.astype(jnp.bfloat16), bh,
    )


def _round_up(x, m):
    return ((x + m - 1) // m) * m


@functools.partial(jax.jit, static_argnames=("action_dim",))
def actor_critic_forward(state, prepared_params, *, action_dim):
    """state: [B, state_dim] f32 -> (action_probs [B, A] f32, state_value [B, 1] f32)."""
    w1, b1, w2, b2, wh, bh = prepared_params
    B, S = state.shape
    head_pad = wh.shape[1]

    # bf16 input: halves the state DMA, precision unchanged (bf16 weights anyway).
    state = state.astype(jnp.bfloat16)

    # Batch tiling: minimize tail padding; force >=2 steps for large B so both
    # v7x TensorCores get work; bm rounded to a sublane (8) multiple.
    if B <= MIN_SPLIT_B:
        steps = 1
    else:
        steps = max(2, pl.cdiv(B, MAX_BM))
    bm = _round_up(pl.cdiv(B, steps), 8)
    steps = pl.cdiv(B, bm)
    Bp = steps * bm
    if Bp != B:
        state = jnp.pad(state, ((0, Bp - B), (0, 0)))

    out = pl.pallas_call(
        functools.partial(actor_critic_kernel, bf16_elementwise=_BF16_EW),
        out_shape=jax.ShapeDtypeStruct((Bp, head_pad), jnp.bfloat16),
        grid=(steps,),
        in_specs=[
            pl.BlockSpec((bm, S), lambda i: (i, 0)),             # state: tiled over batch
            pl.BlockSpec((S, HIDDEN), lambda i: (0, 0)),          # weights: VMEM-resident
            pl.BlockSpec((1, HIDDEN), lambda i: (0, 0)),
            pl.BlockSpec((HIDDEN, HIDDEN), lambda i: (0, 0)),
            pl.BlockSpec((1, HIDDEN), lambda i: (0, 0)),
            pl.BlockSpec((HIDDEN, head_pad), lambda i: (0, 0)),
            pl.BlockSpec((1, head_pad), lambda i: (0, 0)),
        ],
        out_specs=pl.BlockSpec((bm, head_pad), lambda i: (i, 0)),
        compiler_params=pltpu.CompilerParams(
            dimension_semantics=("parallel",),  # v7x: shard batch across 2 TCs
        ),
    )(state, w1, b1, w2, b2, wh, bh)

    out_f32 = out[:B].astype(jnp.float32)
    # tanh on just [B, action_dim] in the wrapper (tiny vs 128-lane in-kernel tanh).
    action_probs = jnp.tanh(out_f32[:, :action_dim])
    # TODO(synk): critic value passes through a bf16 store (~3 decimal digits);
    # keep an f32 store for the value lane if these feed training-loss targets.
    state_value = out_f32[:, action_dim:action_dim + 1]
    return action_probs, state_value


def init_params(key, state_dim, action_dim, hidden=HIDDEN):
    """Deterministic init mimicking PyTorch nn.Linear default (U[-1/sqrt(fan_in), +])."""
    def linear(key, fan_in, fan_out):
        kw, kb = jax.random.split(key)
        bound = 1.0 / jnp.sqrt(fan_in)
        w = jax.random.uniform(kw, (fan_in, fan_out), jnp.float32, -bound, bound)
        b = jax.random.uniform(kb, (1, fan_out), jnp.float32, -bound, bound)
        return w, b

    k1, k2, k3, k4 = jax.random.split(key, 4)
    w1, b1 = linear(k1, state_dim, hidden)
    w2, b2 = linear(k2, hidden, hidden)
    wa, ba = linear(k3, hidden, action_dim)
    wc, bc = linear(k4, hidden, 1)
    return (w1, b1, w2, b2, wa, ba, wc, bc)


if __name__ == "__main__":
    B, STATE_DIM, ACTION_DIM = 8, 16, 4

    key = jax.random.PRNGKey(0)
    k_params, k_state = jax.random.split(key)

    params = init_params(k_params, STATE_DIM, ACTION_DIM)
    state = jax.random.normal(k_state, (B, STATE_DIM), dtype=jnp.float32)

    prepared = prepare_params(params, ACTION_DIM)
    action_probs, state_value = actor_critic_forward(
        state, prepared, action_dim=ACTION_DIM
    )
    jax.block_until_ready((action_probs, state_value))

    # Pure-JAX f32 reference of the same math (kernel uses bf16 MXU inputs with
    # f32 accumulation and a bf16 output slab, so tolerance is relaxed).
    w1, b1, w2, b2, wa, ba, wc, bc = params
    x = jnp.maximum(state @ w1 + b1, 0.0)
    x = jnp.maximum(x @ w2 + b2, 0.0)
    ref_ap = jnp.tanh(x @ wa + ba)
    ref_sv = x @ wc + bc

    assert action_probs.shape == (B, ACTION_DIM)
    assert state_value.shape == (B, 1)
    assert jnp.allclose(action_probs, ref_ap, atol=5e-2, rtol=5e-2), (
        jnp.max(jnp.abs(action_probs - ref_ap)))
    assert jnp.allclose(state_value, ref_sv, atol=5e-2, rtol=5e-2), (
        jnp.max(jnp.abs(state_value - ref_sv)))

    print("KERNEL_OK")
</pallas_src>

<mosaic_0001>
module attributes {stable_mosaic.version = 11 : i64} {
  func.func @actor_critic_kernel(%arg0: i32, %arg1: memref<8x16xbf16, #tpu.memory_space<vmem>>, %arg2: memref<16x128xbf16, #tpu.memory_space<vmem>>, %arg3: memref<1x128xf32, #tpu.memory_space<vmem>>, %arg4: memref<128x128xbf16, #tpu.memory_space<vmem>>, %arg5: memref<1x128xf32, #tpu.memory_space<vmem>>, %arg6: memref<128x128xbf16, #tpu.memory_space<vmem>>, %arg7: memref<1x128xf32, #tpu.memory_space<vmem>>, %arg8: memref<8x128xbf16, #tpu.memory_space<vmem>>) attributes {dimension_semantics = [#tpu.dimension_semantics<parallel>], iteration_bounds = array<i64: 1>, scalar_prefetch = 0 : i64, scratch_operands = 0 : i64, tpu.core_type = #tpu.core_type<tc>, window_params = [{transform_indices = @transform_0, window_bounds = array<i64: 8, 16>}, {pipeline_mode = #tpu.pipeline_mode<synchronous>, transform_indices = @transform_1, window_bounds = array<i64: 16, 128>}, {pipeline_mode = #tpu.pipeline_mode<synchronous>, transform_indices = @transform_2, window_bounds = array<i64: 1, 128>}, {pipeline_mode = #tpu.pipeline_mode<synchronous>, transform_indices = @transform_3, window_bounds = array<i64: 128, 128>}, {pipeline_mode = #tpu.pipeline_mode<synchronous>, transform_indices = @transform_4, window_bounds = array<i64: 1, 128>}, {pipeline_mode = #tpu.pipeline_mode<synchronous>, transform_indices = @transform_5, window_bounds = array<i64: 128, 128>}, {pipeline_mode = #tpu.pipeline_mode<synchronous>, transform_indices = @transform_6, window_bounds = array<i64: 1, 128>}, {transform_indices = @transform_7, window_bounds = array<i64: 8, 128>}]} {
    %c0 = arith.constant 0 : index
    %c0_0 = arith.constant 0 : index
    %0 = vector.load %arg1[%c0, %c0_0] : memref<8x16xbf16, #tpu.memory_space<vmem>>, vector<8x16xbf16>
    %c0_1 = arith.constant 0 : index
    %c0_2 = arith.constant 0 : index
    %1 = vector.load %arg3[%c0_1, %c0_2] : memref<1x128xf32, #tpu.memory_space<vmem>>, vector<1x128xf32>
    %c0_3 = arith.constant 0 : index
    %c0_4 = arith.constant 0 : index
    %2 = vector.load %arg5[%c0_3, %c0_4] : memref<1x128xf32, #tpu.memory_space<vmem>>, vector<1x128xf32>
    %c0_5 = arith.constant 0 : index
    %c0_6 = arith.constant 0 : index
    %3 = vector.load %arg2[%c0_5, %c0_6] : memref<16x128xbf16, #tpu.memory_space<vmem>>, vector<16x128xbf16>
    %cst = arith.constant dense<0.000000e+00> : vector<8x128xf32>
    %4 = tpu.matmul %0, %3, %cst {dimension_numbers = #tpu.dot_dimension_numbers<[1], [0], [0], [1], [0, 0, 1, 1], [], []>} : vector<8x16xbf16>, vector<16x128xbf16>, vector<8x128xf32> -> vector<8x128xf32>
    %5 = vector.broadcast %1 : vector<1x128xf32> to vector<8x128xf32>
    %6 = arith.addf %4, %5 : vector<8x128xf32>
    %cst_7 = arith.constant 0.000000e+00 : f32
    %7 = vector.broadcast %cst_7 : f32 to vector<8x128xf32>
    %8 = arith.maximumf %6, %7 : vector<8x128xf32>
    %9 = arith.truncf %8 : vector<8x128xf32> to vector<8x128xbf16>
    %c0_8 = arith.constant 0 : index
    %c0_9 = arith.constant 0 : index
    %10 = vector.load %arg4[%c0_8, %c0_9] : memref<128x128xbf16, #tpu.memory_space<vmem>>, vector<128x128xbf16>
    %cst_10 = arith.constant dense<0.000000e+00> : vector<8x128xf32>
    %11 = tpu.matmul %9, %10, %cst_10 {dimension_numbers = #tpu.dot_dimension_numbers<[1], [0], [0], [1], [0, 0, 1, 1], [], []>} : vector<8x128xbf16>, vector<128x128xbf16>, vector<8x128xf32> -> vector<8x128xf32>
    %12 = vector.broadcast %2 : vector<1x128xf32> to vector<8x128xf32>
    %13 = arith.addf %11, %12 : vector<8x128xf32>
    %cst_11 = arith.constant 0.000000e+00 : f32
    %14 = vector.broadcast %cst_11 : f32 to vector<8x128xf32>
    %15 = arith.maximumf %13, %14 : vector<8x128xf32>
    %16 = arith.truncf %15 : vector<8x128xf32> to vector<8x128xbf16>
    %c0_12 = arith.constant 0 : index
    %c0_13 = arith.constant 0 : index
    %17 = vector.load %arg6[%c0_12, %c0_13] : memref<128x128xbf16, #tpu.memory_space<vmem>>, vector<128x128xbf16>
    %cst_14 = arith.constant dense<0.000000e+00> : vector<8x128xf32>
    %18 = tpu.matmul %16, %17, %cst_14 {dimension_numbers = #tpu.dot_dimension_numbers<[1], [0], [0], [1], [0, 0, 1, 1], [], []>} : vector<8x128xbf16>, vector<128x128xbf16>, vector<8x128xf32> -> vector<8x128xf32>
    %c0_15 = arith.constant 0 : index
    %c0_16 = arith.constant 0 : index
    %19 = vector.load %arg7[%c0_15, %c0_16] : memref<1x128xf32, #tpu.memory_space<vmem>>, vector<1x128xf32>
    %20 = vector.broadcast %19 : vector<1x128xf32> to vector<8x128xf32>
    %21 = arith.addf %18, %20 : vector<8x128xf32>
    %22 = arith.truncf %21 : vector<8x128xf32> to vector<8x128xbf16>
    %c0_17 = arith.constant 0 : index
    %c0_18 = arith.constant 0 : index
    %23 = vector.load %arg8[%c0_17, %c0_18] : memref<8x128xbf16, #tpu.memory_space<vmem>>, vector<8x128xbf16>
    tpu.vector_store %arg8[%c0_17, %c0_18], %22 {strides = array<i32>} : memref<8x128xbf16, #tpu.memory_space<vmem>>, vector<8x128xbf16>,
    return
  }
  func.func @transform_0(%arg0: i32) -> (i32, i32) {
    %c0_i32 = arith.constant 0 : i32
    %c0_i32_0 = arith.constant 0 : i32
    return %arg0, %c0_i32 : i32, i32
  }
  func.func @transform_1(%arg0: i32) -> (i32, i32) {
    %c0_i32 = arith.constant 0 : i32
    %c0_i32_0 = arith.constant 0 : i32
    %c0_i32_1 = arith.constant 0 : i32
    return %c0_i32, %c0_i32_0 : i32, i32
  }
  func.func @transform_2(%arg0: i32) -> (i32, i32) {
    %c0_i32 = arith.constant 0 : i32
    %c0_i32_0 = arith.constant 0 : i32
    %c0_i32_1 = arith.constant 0 : i32
    return %c0_i32, %c0_i32_0 : i32, i32
  }
  func.func @transform_3(%arg0: i32) -> (i32, i32) {
    %c0_i32 = arith.constant 0 : i32
    %c0_i32_0 = arith.constant 0 : i32
    %c0_i32_1 = arith.constant 0 : i32
    return %c0_i32, %c0_i32_0 : i32, i32
  }
  func.func @transform_4(%arg0: i32) -> (i32, i32) {
    %c0_i32 = arith.constant 0 : i32
    %c0_i32_0 = arith.constant 0 : i32
    %c0_i32_1 = arith.constant 0 : i32
    return %c0_i32, %c0_i32_0 : i32, i32
  }
  func.func @transform_5(%arg0: i32) -> (i32, i32) {
    %c0_i32 = arith.constant 0 : i32
    %c0_i32_0 = arith.constant 0 : i32
    %c0_i32_1 = arith.constant 0 : i32
    return %c0_i32, %c0_i32_0 : i32, i32
  }
  func.func @transform_6(%arg0: i32) -> (i32, i32) {
    %c0_i32 = arith.constant 0 : i32
    %c0_i32_0 = arith.constant 0 : i32
    %c0_i32_1 = arith.constant 0 : i32
    return %c0_i32, %c0_i32_0 : i32, i32
  }
  func.func @transform_7(%arg0: i32) -> (i32, i32) {
    %c0_i32 = arith.constant 0 : i32
    %c0_i32_0 = arith.constant 0 : i32
    return %arg0, %c0_i32 : i32, i32
  }
}

</mosaic_0001>

<llo_original>
// kernel: actor_critic_forward.1
$region0: #{actor_critic_forward.1}
  #allocation0 [shape = 'u32[]', space=smem, size = 0x4, offset = 0x4, fixed_abs, tag = 'smem constant byte address 0x4 - core index']
  #allocation1 [shape = 'u32[144,128]{1,0:T(1,128)}', space=vmem, size = 0x12000, scoped, tag = 'internal scratch']
  %s0 = inlined_call_operand.vmem [shape: bf16[8,16], index: 0, kind: input, shape index: {}]
  %s1 = inlined_call_operand.vmem [shape: bf16[16,128], index: 1, kind: input, shape index: {}]
  %s2 = inlined_call_operand.vmem [shape: f32[1,128], index: 2, kind: input, shape index: {}]
  %s3 = inlined_call_operand.hbm [shape: bf16[128,128], index: 3, kind: input, shape index: {}]
  %s4 = inlined_call_operand.vmem [shape: f32[1,128], index: 4, kind: input, shape index: {}]
  %s5 = inlined_call_operand.hbm [shape: bf16[128,128], index: 5, kind: input, shape index: {}]
  %s6 = inlined_call_operand.vmem [shape: f32[1,128], index: 6, kind: input, shape index: {}]
  %s7 = inlined_call_operand.vmem [shape: bf16[8,128], index: 7, kind: output, shape index: {}]
  %s8 = sld [smem:[#allocation0]]
  $region46: #{actor_critic_forward.1} parent=0
    _
  %s10 = ssub.s32 1, %s8
  %s11 = scalar_select 0, %s10, %s8
  $region1: #{actor_critic_forward.1} parent=0
    #allocation2 [shape = 'u8[32768]{0}', space=vmem, size = 0x8000, scoped, tag = 'input window, operand 3, single buffered']
    #allocation3 [shape = 's32[1]{0}', space=sflag, size = 0x4, scoped, tag = 'scoped memory for actor_critic_forward.1']
    #allocation4 [shape = 'u8[32768]{0}', space=vmem, size = 0x8000, scoped, tag = 'input window, operand 5, single buffered']
    #allocation5 [shape = 's32[1]{0}', space=sflag, size = 0x4, scoped, tag = 'scoped memory for actor_critic_forward.1']
    %12 = vsyncpa [#allocation3], 0
    %13 = vsyncpa [#allocation5], 0
    // Predicated region
    $region2: #{actor_critic_forward.1} parent=1 // pred_check
      _
    $region3: #{actor_critic_forward.1} parent=1 // pred_check_branch
      %15 = sbr.rel (0) target = $region5
    $region4: #{actor_critic_forward.1} parent=1 // pred_region
      _
    $region5: #{actor_critic_forward.1} parent=1 // pred_fallthru
      _
    // Predicated region
    $region6: #{actor_critic_forward.1} parent=1 // pred_check
      _
    $region7: #{actor_critic_forward.1} parent=1 // pred_check_branch
      %17 = sbr.rel (0) target = $region9
    $region8: #{actor_critic_forward.1} parent=1 // pred_region
      _
    $region9: #{actor_critic_forward.1} parent=1 // pred_fallthru
      _
    // Predicated region
    $region10: #{actor_critic_forward.1} parent=1 // pred_check
      _
    $region11: #{actor_critic_forward.1} parent=1 // pred_check_branch
      %19 = sbr.rel (0) target = $region13
    $region12: #{actor_critic_forward.1} parent=1 // pred_region
      _
    $region13: #{actor_critic_forward.1} parent=1 // pred_fallthru
      _
    // Predicated region
    $region14: #{actor_critic_forward.1} parent=1 // pred_check
      _
    $region15: #{actor_critic_forward.1} parent=1 // pred_check_branch
      %21 = sbr.rel (0) target = $region17
    $region16: #{actor_critic_forward.1} parent=1 // pred_region
      %s23 = ssub.s32 1024, 1024
      %24 = vsyncadd [#allocation3], %s23
      %s25 = sshll.u32 [#allocation2], 4
      %s26 = int_to_ptr.vmem [resolvable:$true] %s25
      %31 = dma.hbm_to_vmem [thread:$0]  %s3, 1024, %s26, [#allocation3], 64, 64, 4
    $region17: #{actor_critic_forward.1} parent=1 // pred_fallthru
      _
    // Predicated region
    $region18: #{actor_critic_forward.1} parent=1 // pred_check
      _
    $region19: #{actor_critic_forward.1} parent=1 // pred_check_branch
      %33 = sbr.rel (0) target = $region21
    $region20: #{actor_critic_forward.1} parent=1 // pred_region
      _
    $region21: #{actor_critic_forward.1} parent=1 // pred_fallthru
      _
    // Predicated region
    $region22: #{actor_critic_forward.1} parent=1 // pred_check
      _
    $region23: #{actor_critic_forward.1} parent=1 // pred_check_branch
      %35 = sbr.rel (0) target = $region25
    $region24: #{actor_critic_forward.1} parent=1 // pred_region
      %s37 = ssub.s32 1024, 1024
      %38 = vsyncadd [#allocation5], %s37
      %s39 = sshll.u32 [#allocation4], 4
      %s40 = int_to_ptr.vmem [resolvable:$true] %s39
      %45 = dma.hbm_to_vmem [thread:$0]  %s5, 1024, %s40, [#allocation5], 64, 64, 4
    $region25: #{actor_critic_forward.1} parent=1 // pred_fallthru
      _
    // Predicated region
    $region26: #{actor_critic_forward.1} parent=1 // pred_check
      _
    $region27: #{actor_critic_forward.1} parent=1 // pred_check_branch
      %47 = sbr.rel (0) target = $region29
    $region28: #{actor_critic_forward.1} parent=1 // pred_region
      _
    $region29: #{actor_critic_forward.1} parent=1 // pred_fallthru
      _
    // Predicated region
    $region30: #{actor_critic_forward.1} parent=1 // pred_check
      _
    $region31: #{actor_critic_forward.1} parent=1 // pred_check_branch
      %49 = sbr.rel (0) target = $region33
    $region32: #{actor_critic_forward.1} parent=1 // pred_region
      %50 = dma.done [#allocation3], 1024
    $region33: #{actor_critic_forward.1} parent=1 // pred_fallthru
      _
    // Predicated region
    $region34: #{actor_critic_forward.1} parent=1 // pred_check
      _
    $region35: #{actor_critic_forward.1} parent=1 // pred_check_branch
      %52 = sbr.rel (0) target = $region37
    $region36: #{actor_critic_forward.1} parent=1 // pred_region
      %53 = dma.done [#allocation5], 1024
    $region37: #{actor_critic_forward.1} parent=1 // pred_fallthru
      _
    %v55 = vld [vmem:[%s0] sm:$0xf]
    %v56 = vld [vmem:[%s2] sm:$0x1]
    %v57 = vld [vmem:[%s4] sm:$0x1]
    %v58 = vld [vmem:[%s1] sm:$0xf]
    %v59 = vld [vmem:[%s1 + $0x4] sm:$0xf]
    %v61 = vlaneseq
    %v62 = vshrl.u32 %v61, 7
    %v63 = vsub.s32 0, %v62
    %v64 = vrot.slane %v56, %v63
    %v68 = vunpack.c.l.b16 %v58
    %v69 = vunpack.c.l.b16 %v59
    %v70 = vpack.c.b16 %v69, %v68
    %vm72 = vcmask 130048
    %v74 = vsel %vm72, %v55, 0
    %76 = vmatprep.subr.bf16.mxu0 0
    %77 = vmatpush1.bf16.msra.mxu0 %v70
    %78 = vmatprep.subr.bf16.mxu0 0
    %79 = vmatpush1.bf16.msra.mxu0 0
    %80 = vmatprep.subr.bf16.mxu0 0
    %81 = vmatpush1.bf16.msra.mxu0 0
    %82 = vmatprep.subr.bf16.mxu0 0
    %83 = vmatpush1.bf16.msra.mxu0 0
    %84 = vmatprep.subr.bf16.mxu0 0
    %85 = vmatpush1.bf16.msra.mxu0 0
    %86 = vmatprep.subr.bf16.mxu0 0
    %87 = vmatpush1.bf16.msra.mxu0 0
    %88 = vmatprep.subr.bf16.mxu0 0
    %89 = vmatpush1.bf16.msra.mxu0 0
    %90 = vmatprep.subr.bf16.mxu0 0
    %91 = vmatpush1.bf16.msra.mxu0 0
    %92 = vmatprep.subr.bf16.mxu0 0
    %93 = vmatpush1.bf16.msra.mxu0 0
    %94 = vmatprep.subr.bf16.mxu0 0
    %95 = vmatpush1.bf16.msra.mxu0 0
    %96 = vmatprep.subr.bf16.mxu0 0
    %97 = vmatpush1.bf16.msra.mxu0 0
    %98 = vmatprep.subr.bf16.mxu0 0
    %99 = vmatpush1.bf16.msra.mxu0 0
    %100 = vmatprep.subr.bf16.mxu0 0
    %101 = vmatpush1.bf16.msra.mxu0 0
    %102 = vmatprep.subr.bf16.mxu0 0
    %103 = vmatpush1.bf16.msra.mxu0 0
    %104 = vmatprep.subr.bf16.mxu0 0
    %105 = vmatpush1.bf16.msra.mxu0 0
    %106 = vmatprep.subr.bf16.mxu0 0
    %107 = vmatpush1.bf16.msra.mxu0 0
    %108 = vmatprep.mubr.bf16.mxu0 0
    %109 = vmatmul.mubr.bf16.gmra.mrb[0].mxu0 %v74
    %v110 = vpop.f32.mrb[0].mxu0
    %v111 = vadd.f32 %v64, %v110
    %v112 = vpop.f32.mrb[0].mxu0
    %v113 = vpop.f32.mrb[0].mxu0
    %v114 = vpop.f32.mrb[0].mxu0
    %115 = vdwg.mxu0
    %v116 = vmax.f32 %v111, 0.0
    %v117 = vpack.c.bf16 %v116, %v116
    %v118 = vld [vmem:[#allocation2] sm:$0xf]
    %v119 = vld [vmem:[#allocation2 + $0x4] sm:$0xf]
    %v120 = vld [vmem:[#allocation2 + $0x8] sm:$0xf]
    %v121 = vld [vmem:[#allocation2 + $0xc] sm:$0xf]
    %v122 = vld [vmem:[#allocation2 + $0x10] sm:$0xf]
    %v123 = vld [vmem:[#allocation2 + $0x14] sm:$0xf]
    %v124 = vld [vmem:[#allocation2 + $0x18] sm:$0xf]
    %v125 = vld [vmem:[#allocation2 + $0x1c] sm:$0xf]
    %v126 = vld [vmem:[#allocation2 + $0x20] sm:$0xf]
    %v127 = vld [vmem:[#allocation2 + $0x24] sm:$0xf]
    %v128 = vld [vmem:[#allocation2 + $0x28] sm:$0xf]
    %v129 = vld [vmem:[#allocation2 + $0x2c] sm:$0xf]
    %v130 = vld [vmem:[#allocation2 + $0x30] sm:$0xf]
    %v131 = vld [vmem:[#allocation2 + $0x34] sm:$0xf]
    %v132 = vld [vmem:[#allocation2 + $0x38] sm:$0xf]
    %v133 = vld [vmem:[#allocation2 + $0x3c] sm:$0xf]
    %v135 = vlaneseq
    %v136 = vshrl.u32 %v135, 7
    %v137 = vsub.s32 0, %v136
    %v138 = vrot.slane %v57, %v137
    %v156 = vunpack.c.l.b16 %v118
    %v157 = vunpack.c.l.b16 %v119
    %v158 = vunpack.c.l.b16 %v120
    %v159 = vunpack.c.l.b16 %v121
    %v160 = vunpack.c.l.b16 %v122
    %v161 = vunpack.c.l.b16 %v123
    %v162 = vunpack.c.l.b16 %v124
    %v163 = vunpack.c.l.b16 %v125
    %v164 = vunpack.c.l.b16 %v126
    %v165 = vunpack.c.l.b16 %v127
    %v166 = vunpack.c.l.b16 %v128
    %v167 = vunpack.c.l.b16 %v129
    %v168 = vunpack.c.l.b16 %v130
    %v169 = vunpack.c.l.b16 %v131
    %v170 = vunpack.c.l.b16 %v132
    %v171 = vunpack.c.l.b16 %v133
    %v172 = vpack.c.b16 %v157, %v156
    %v173 = vpack.c.b16 %v159, %v158
    %v174 = vpack.c.b16 %v161, %v160
    %v175 = vpack.c.b16 %v163, %v162
    %v176 = vpack.c.b16 %v165, %v164
    %v177 = vpack.c.b16 %v167, %v166
    %v178 = vpack.c.b16 %v169, %v168
    %v179 = vpack.c.b16 %v171, %v170
    %188 = vmatprep.subr.bf16.mxu0 0
    %189 = vmatpush1.bf16.msra.mxu0 %v172
    %190 = vmatprep.subr.bf16.mxu0 0
    %191 = vmatpush1.bf16.msra.mxu0 %v173
    %192 = vmatprep.subr.bf16.mxu0 0
    %193 = vmatpush1.bf16.msra.mxu0 %v174
    %194 = vmatprep.subr.bf16.mxu0 0
    %195 = vmatpush1.bf16.msra.mxu0 %v175
    %196 = vmatprep.subr.bf16.mxu0 0
    %197 = vmatpush1.bf16.msra.mxu0 %v176
    %198 = vmatprep.subr.bf16.mxu0 0
    %199 = vmatpush1.bf16.msra.mxu0 %v177
    %200 = vmatprep.subr.bf16.mxu0 0
    %201 = vmatpush1.bf16.msra.mxu0 %v178
    %202 = vmatprep.subr.bf16.mxu0 0
    %203 = vmatpush1.bf16.msra.mxu0 %v179
    %204 = vmatprep.subr.bf16.mxu0 0
    %205 = vmatpush1.bf16.msra.mxu0 0
    %206 = vmatprep.subr.bf16.mxu0 0
    %207 = vmatpush1.bf16.msra.mxu0 0
    %208 = vmatprep.subr.bf16.mxu0 0
    %209 = vmatpush1.bf16.msra.mxu0 0
    %210 = vmatprep.subr.bf16.mxu0 0
    %211 = vmatpush1.bf16.msra.mxu0 0
    %212 = vmatprep.subr.bf16.mxu0 0
    %213 = vmatpush1.bf16.msra.mxu0 0
    %214 = vmatprep.subr.bf16.mxu0 0
    %215 = vmatpush1.bf16.msra.mxu0 0
    %216 = vmatprep.subr.bf16.mxu0 0
    %217 = vmatpush1.bf16.msra.mxu0 0
    %218 = vmatprep.subr.bf16.mxu0 0
    %219 = vmatpush1.bf16.msra.mxu0 0
    %220 = vmatprep.mubr.bf16.mxu0 0
    %221 = vmatmul.mubr.bf16.gmra.mrb[0].mxu0 %v117
    %v222 = vpop.f32.mrb[0].mxu0
    %v223 = vadd.f32 %v138, %v222
    %v224 = vpop.f32.mrb[0].mxu0
    %v225 = vpop.f32.mrb[0].mxu0
    %v226 = vpop.f32.mrb[0].mxu0
    %227 = vdwg.mxu0
    %v228 = vmax.f32 %v223, 0.0
    %v229 = vpack.c.bf16 %v228, %v228
    %v230 = vld [vmem:[#allocation4] sm:$0xf]
    %v231 = vld [vmem:[#allocation4 + $0x4] sm:$0xf]
    %v232 = vld [vmem:[#allocation4 + $0x8] sm:$0xf]
    %v233 = vld [vmem:[#allocation4 + $0xc] sm:$0xf]
    %v234 = vld [vmem:[#allocation4 + $0x10] sm:$0xf]
    %v235 = vld [vmem:[#allocation4 + $0x14] sm:$0xf]
    %v236 = vld [vmem:[#allocation4 + $0x18] sm:$0xf]
    %v237 = vld [vmem:[#allocation4 + $0x1c] sm:$0xf]
    %v238 = vld [vmem:[#allocation4 + $0x20] sm:$0xf]
    %v239 = vld [vmem:[#allocation4 + $0x24] sm:$0xf]
    %v240 = vld [vmem:[#allocation4 + $0x28] sm:$0xf]
    %v241 = vld [vmem:[#allocation4 + $0x2c] sm:$0xf]
    %v242 = vld [vmem:[#allocation4 + $0x30] sm:$0xf]
    %v243 = vld [vmem:[#allocation4 + $0x34] sm:$0xf]
    %v244 = vld [vmem:[#allocation4 + $0x38] sm:$0xf]
    %v245 = vld [vmem:[#allocation4 + $0x3c] sm:$0xf]
    %v246 = vld [vmem:[%s6] sm:$0x1]
    %v248 = vlaneseq
    %v249 = vshrl.u32 %v248, 7
    %v250 = vsub.s32 0, %v249
    %v251 = vrot.slane %v246, %v250
    %v269 = vunpack.c.l.b16 %v230
    %v270 = vunpack.c.l.b16 %v231
    %v271 = vunpack.c.l.b16 %v232
    %v272 = vunpack.c.l.b16 %v233
    %v273 = vunpack.c.l.b16 %v234
    %v274 = vunpack.c.l.b16 %v235
    %v275 = vunpack.c.l.b16 %v236
    %v276 = vunpack.c.l.b16 %v237
    %v277 = vunpack.c.l.b16 %v238
    %v278 = vunpack.c.l.b16 %v239
    %v279 = vunpack.c.l.b16 %v240
    %v280 = vunpack.c.l.b16 %v241
    %v281 = vunpack.c.l.b16 %v242
    %v282 = vunpack.c.l.b16 %v243
    %v283 = vunpack.c.l.b16 %v244
    %v284 = vunpack.c.l.b16 %v245
    %v285 = vpack.c.b16 %v270, %v269
    %v286 = vpack.c.b16 %v272, %v271
    %v287 = vpack.c.b16 %v274, %v273
    %v288 = vpack.c.b16 %v276, %v275
    %v289 = vpack.c.b16 %v278, %v277
    %v290 = vpack.c.b16 %v280, %v279
    %v291 = vpack.c.b16 %v282, %v281
    %v292 = vpack.c.b16 %v284, %v283
    %301 = vmatprep.subr.bf16.mxu0 0
    %302 = vmatpush1.bf16.msra.mxu0 %v285
    %303 = vmatprep.subr.bf16.mxu0 0
    %304 = vmatpush1.bf16.msra.mxu0 %v286
    %305 = vmatprep.subr.bf16.mxu0 0
    %306 = vmatpush1.bf16.msra.mxu0 %v287
    %307 = vmatprep.subr.bf16.mxu0 0
    %308 = vmatpush1.bf16.msra.mxu0 %v288
    %309 = vmatprep.subr.bf16.mxu0 0
    %310 = vmatpush1.bf16.msra.mxu0 %v289
    %311 = vmatprep.subr.bf16.mxu0 0
    %312 = vmatpush1.bf16.msra.mxu0 %v290
    %313 = vmatprep.subr.bf16.mxu0 0
    %314 = vmatpush1.bf16.msra.mxu0 %v291
    %315 = vmatprep.subr.bf16.mxu0 0
    %316 = vmatpush1.bf16.msra.mxu0 %v292
    %317 = vmatprep.subr.bf16.mxu0 0
    %318 = vmatpush1.bf16.msra.mxu0 0
    %319 = vmatprep.subr.bf16.mxu0 0
    %320 = vmatpush1.bf16.msra.mxu0 0
    %321 = vmatprep.subr.bf16.mxu0 0
    %322 = vmatpush1.bf16.msra.mxu0 0
    %323 = vmatprep.subr.bf16.mxu0 0
    %324 = vmatpush1.bf16.msra.mxu0 0
    %325 = vmatprep.subr.bf16.mxu0 0
    %326 = vmatpush1.bf16.msra.mxu0 0
    %327 = vmatprep.subr.bf16.mxu0 0
    %328 = vmatpush1.bf16.msra.mxu0 0
    %329 = vmatprep.subr.bf16.mxu0 0
    %330 = vmatpush1.bf16.msra.mxu0 0
    %331 = vmatprep.subr.bf16.mxu0 0
    %332 = vmatpush1.bf16.msra.mxu0 0
    %333 = vmatprep.mubr.bf16.mxu0 0
    %334 = vmatmul.mubr.bf16.gmra.mrb[0].mxu0 %v229
    %v335 = vpop.f32.mrb[0].mxu0
    %v336 = vadd.f32 %v251, %v335
    %v337 = vpop.f32.mrb[0].mxu0
    %v338 = vpop.f32.mrb[0].mxu0
    %v339 = vpop.f32.mrb[0].mxu0
    %340 = vdwg.mxu0
    %v341 = vpack.c.bf16 %v336, %v336
    %342 = vst [vmem:[%s7] sm:$0xf] %v341
    // Predicated region
    $region38: #{actor_critic_forward.1} parent=1 // pred_check
      _
    $region39: #{actor_critic_forward.1} parent=1 // pred_check_branch
      %344 = sbr.rel (0) target = $region41
    $region40: #{actor_critic_forward.1} parent=1 // pred_region
      _
    $region41: #{actor_critic_forward.1} parent=1 // pred_fallthru
      _
    // Predicated region
    $region42: #{actor_critic_forward.1} parent=1 // pred_check
      _
    $region43: #{actor_critic_forward.1} parent=1 // pred_check_branch
      %346 = sbr.rel (0) target = $region45
    $region44: #{actor_critic_forward.1} parent=1 // pred_region
      _
    $region45: #{actor_critic_forward.1} parent=1 // pred_fallthru
      _
    %347 = vsyncpa [#allocation3], 1
    %348 = vsyncpa [#allocation5], 1

</llo_original>
